<compile_context>
chip_gen: v5e
topology: v5e:2x2
jax: 0.10.0
libtpu: 0.0.40
codegen_flags: <defaults>
</compile_context>

<pallas_src>
import jax
import jax.numpy as jnp
from jax.experimental import pallas as pl
from jax.experimental.pallas import tpu as pltpu


D_IN, H1, H2, D_OUT = 784, 128, 256, 10
D_OUT_PAD = 128   # lane-dense output slab; real logits are [:, :10]


def mlp_kernel(x_ref, w1_ref, b1_ref, w2_ref, b2_ref, w3_ref, b3_ref, o_ref):
    # Fused 3-layer MLP on one batch tile.  The x cast to the matmul dtype is
    # done here (VPU cost hidden under DMA/MXU) instead of a separate XLA pass.
    x = x_ref[...].astype(w1_ref.dtype)

    h1 = jnp.dot(x, w1_ref[...], preferred_element_type=jnp.float32)
    h1 = jnp.maximum(h1 + b1_ref[...], 0.0).astype(w2_ref.dtype)

    h2 = jnp.dot(h1, w2_ref[...], preferred_element_type=jnp.float32)
    h2 = jnp.maximum(h2 + b2_ref[...], 0.0).astype(w3_ref.dtype)

    out = jnp.dot(h2, w3_ref[...], preferred_element_type=jnp.float32)
    o_ref[...] = (out + b3_ref[...]).astype(o_ref.dtype)


def _round_up(n, m):
    return ((n + m - 1) // m) * m


def prepare_params(params, *, compute_dtype=jnp.bfloat16):
    """One-time parameter prep (hoisted out of the per-call hot path).

    params: dict with w1 (784,128), b1 (128,), w2 (128,256), b2 (256,),
            w3 (256,10), b3 (10,)  -- weights stored as (in, out).
    Returns a tuple ready to feed to mnist_nn_forward.
    """
    w1 = params["w1"].astype(compute_dtype)                                   # (784,128)
    w2 = params["w2"].astype(compute_dtype)                                   # (128,256)
    # Zero-pad the last layer's output dim 10 -> 128 (exact math; padded logit
    # lanes come out exactly 0 and are sliced away).
    w3 = jnp.pad(params["w3"], ((0, 0), (0, D_OUT_PAD - D_OUT))).astype(compute_dtype)
    b1 = params["b1"].reshape(1, H1).astype(jnp.float32)
    b2 = params["b2"].reshape(1, H2).astype(jnp.float32)
    b3 = jnp.pad(params["b3"], (0, D_OUT_PAD - D_OUT)).reshape(1, D_OUT_PAD).astype(jnp.float32)
    return (w1, b1, w2, b2, w3, b3)


def mnist_nn_forward(x, prepared, *, tb=1024, out_dtype=None):
    """Fused MLP forward.

    x:        (B, 784) array (any float dtype; cast to the compute dtype
              in-kernel; pass bf16 x to halve the dominant HBM stream).
    prepared: output of prepare_params().
    tb:       max batch tile (rows per grid step); clamped so the grid keeps
              >= ~4 steps (2 per v7x TensorCore) when the batch allows it.
    out_dtype: dtype of the stored logits (defaults to the compute dtype).
    """
    w1, b1, w2, b2, w3, b3 = prepared
    compute_dtype = w1.dtype
    out_dtype = compute_dtype if out_dtype is None else out_dtype

    B, d_in = x.shape
    assert d_in == D_IN

    # Sublane alignment: 8 rows for f32, 16 for bf16 (packed sublanes).
    align = 16 if compute_dtype == jnp.bfloat16 else 8
    # Aim for >= 4 grid steps (2 per v7x TC) without exceeding tb or the batch.
    target = _round_up(max(1, pl.cdiv(B, 4)), align)
    tb_eff = max(align, min(_round_up(tb, align), target, _round_up(B, align)))
    grid = (pl.cdiv(B, tb_eff),)   # last block may be partial; safe (row-wise op)

    flops = 2 * B * (D_IN * H1 + H1 * H2 + H2 * D_OUT_PAD)
    w_itemsize = jnp.dtype(compute_dtype).itemsize
    bytes_accessed = (
        B * D_IN * x.dtype.itemsize                                   # x stream
        + (D_IN * H1 + H1 * H2 + H2 * D_OUT_PAD) * w_itemsize          # weights
        + (H1 + H2 + D_OUT_PAD) * 4                                    # biases (f32)
        + B * D_OUT_PAD * jnp.dtype(out_dtype).itemsize                # output
    )

    out_padded = pl.pallas_call(
        mlp_kernel,
        out_shape=jax.ShapeDtypeStruct((B, D_OUT_PAD), out_dtype),
        grid_spec=pltpu.PrefetchScalarGridSpec(
            num_scalar_prefetch=0,
            grid=grid,
            in_specs=[
                # x: tiled over batch; last dim == full array dim (784) so no
                # K-padding pass is needed.
                pl.BlockSpec((tb_eff, D_IN), lambda i: (i, 0)),
                # weights / biases: full arrays, same block every iteration
                # (constant index_map -> resident in VMEM, no per-step re-DMA).
                pl.BlockSpec((D_IN, H1), lambda i: (0, 0)),
                pl.BlockSpec((1, H1), lambda i: (0, 0)),
                pl.BlockSpec((H1, H2), lambda i: (0, 0)),
                pl.BlockSpec((1, H2), lambda i: (0, 0)),
                pl.BlockSpec((H2, D_OUT_PAD), lambda i: (0, 0)),
                pl.BlockSpec((1, D_OUT_PAD), lambda i: (0, 0)),
            ],
            out_specs=pl.BlockSpec((tb_eff, D_OUT_PAD), lambda i: (i, 0)),
        ),
        compiler_params=pltpu.CompilerParams(
            dimension_semantics=("parallel",),
        ),
        cost_estimate=pl.CostEstimate(
            flops=int(flops),
            transcendentals=0,
            bytes_accessed=int(bytes_accessed),
        ),
    )(x, w1, b1, w2, b2, w3, b3)

    # Strip the zero-padded logit lanes.  (Consumers that can work on the
    # padded (B,128) slab should fuse this slice instead of materializing it.)
    return out_padded[:, :D_OUT]


def init_params(key):
    """Deterministic init mimicking PyTorch nn.Linear default (U[-1/sqrt(fan_in), +])."""
    k1, k2, k3, k4, k5, k6 = jax.random.split(key, 6)

    def uniform(k, shape, fan_in):
        bound = 1.0 / jnp.sqrt(fan_in)
        return jax.random.uniform(k, shape, jnp.float32, -bound, bound)

    return {
        # stored as (in_features, out_features) == PyTorch weight.T
        "w1": uniform(k1, (D_IN, H1), 784.0),
        "b1": uniform(k2, (H1,), 784.0),
        "w2": uniform(k3, (H1, H2), 128.0),
        "b2": uniform(k4, (H2,), 128.0),
        "w3": uniform(k5, (H2, D_OUT), 256.0),
        "b3": uniform(k6, (D_OUT,), 256.0),
    }


def reference_forward(x, params):
    h1 = jnp.maximum(x @ params["w1"] + params["b1"], 0.0)
    h2 = jnp.maximum(h1 @ params["w2"] + params["b2"], 0.0)
    return h2 @ params["w3"] + params["b3"]


if __name__ == "__main__":
    key = jax.random.PRNGKey(0)
    kx, kp = jax.random.split(key)

    B = 32  # small demo batch
    x = jax.random.normal(kx, (B, D_IN), jnp.float32)
    params = init_params(kp)
    ref = reference_forward(x, params)

    # bf16 matmul-input path (default; MXU-native on v5e/v6e/v7x), f32 accumulation.
    prep_bf16 = prepare_params(params)  # compute_dtype=bf16 by default
    out = jax.block_until_ready(mnist_nn_forward(x, prep_bf16))
    assert out.shape == (B, D_OUT)
    assert jnp.allclose(out.astype(jnp.float32), ref, atol=1e-1, rtol=1e-1)

    # f32 path -- tight tolerance against the pure-JAX reference.
    prep_f32 = prepare_params(params, compute_dtype=jnp.float32)
    out32 = jax.block_until_ready(mnist_nn_forward(x, prep_f32))
    assert out32.shape == (B, D_OUT)
    assert jnp.allclose(out32, ref, atol=1e-3, rtol=1e-3)

    # Ragged batch (not a multiple of the tile) -> exercises the partial last
    # block handled by Pallas (no wrapper-side batch padding anymore).
    out_r = jax.block_until_ready(mnist_nn_forward(x[:19], prep_f32))
    assert out_r.shape == (19, D_OUT)
    assert jnp.allclose(out_r, ref[:19], atol=1e-3, rtol=1e-3)

    print("KERNEL_OK")
</pallas_src>

<mosaic_0001>
module attributes {stable_mosaic.version = 11 : i64} {
  func.func @mlp_kernel(%arg0: i32, %arg1: memref<16x784xf32, #tpu.memory_space<vmem>>, %arg2: memref<784x128xbf16, #tpu.memory_space<vmem>>, %arg3: memref<1x128xf32, #tpu.memory_space<vmem>>, %arg4: memref<128x256xbf16, #tpu.memory_space<vmem>>, %arg5: memref<1x256xf32, #tpu.memory_space<vmem>>, %arg6: memref<256x128xbf16, #tpu.memory_space<vmem>>, %arg7: memref<1x128xf32, #tpu.memory_space<vmem>>, %arg8: memref<16x128xbf16, #tpu.memory_space<vmem>>) attributes {dimension_semantics = [#tpu.dimension_semantics<parallel>], iteration_bounds = array<i64: 2>, scalar_prefetch = 0 : i64, scratch_operands = 0 : i64, tpu.core_type = #tpu.core_type<tc>, window_params = [{transform_indices = @transform_0, window_bounds = array<i64: 16, 784>}, {pipeline_mode = #tpu.pipeline_mode<synchronous>, transform_indices = @transform_1, window_bounds = array<i64: 784, 128>}, {pipeline_mode = #tpu.pipeline_mode<synchronous>, transform_indices = @transform_2, window_bounds = array<i64: 1, 128>}, {pipeline_mode = #tpu.pipeline_mode<synchronous>, transform_indices = @transform_3, window_bounds = array<i64: 128, 256>}, {pipeline_mode = #tpu.pipeline_mode<synchronous>, transform_indices = @transform_4, window_bounds = array<i64: 1, 256>}, {pipeline_mode = #tpu.pipeline_mode<synchronous>, transform_indices = @transform_5, window_bounds = array<i64: 256, 128>}, {pipeline_mode = #tpu.pipeline_mode<synchronous>, transform_indices = @transform_6, window_bounds = array<i64: 1, 128>}, {transform_indices = @transform_7, window_bounds = array<i64: 16, 128>}]} {
    %c0 = arith.constant 0 : index
    %c0_0 = arith.constant 0 : index
    %0 = vector.load %arg1[%c0, %c0_0] : memref<16x784xf32, #tpu.memory_space<vmem>>, vector<16x784xf32>
    %1 = arith.truncf %0 : vector<16x784xf32> to vector<16x784xbf16>
    %c0_1 = arith.constant 0 : index
    %c0_2 = arith.constant 0 : index
    %2 = vector.load %arg2[%c0_1, %c0_2] : memref<784x128xbf16, #tpu.memory_space<vmem>>, vector<784x128xbf16>
    %cst = arith.constant dense<0.000000e+00> : vector<16x128xf32>
    %3 = tpu.matmul %1, %2, %cst {dimension_numbers = #tpu.dot_dimension_numbers<[1], [0], [0], [1], [0, 0, 1, 1], [], []>} : vector<16x784xbf16>, vector<784x128xbf16>, vector<16x128xf32> -> vector<16x128xf32>
    %c0_3 = arith.constant 0 : index
    %c0_4 = arith.constant 0 : index
    %4 = vector.load %arg3[%c0_3, %c0_4] : memref<1x128xf32, #tpu.memory_space<vmem>>, vector<1x128xf32>
    %5 = vector.broadcast %4 : vector<1x128xf32> to vector<16x128xf32>
    %6 = arith.addf %3, %5 : vector<16x128xf32>
    %cst_5 = arith.constant 0.000000e+00 : f32
    %7 = vector.broadcast %cst_5 : f32 to vector<16x128xf32>
    %8 = arith.maximumf %6, %7 : vector<16x128xf32>
    %9 = arith.truncf %8 : vector<16x128xf32> to vector<16x128xbf16>
    %c0_6 = arith.constant 0 : index
    %c0_7 = arith.constant 0 : index
    %10 = vector.load %arg4[%c0_6, %c0_7] : memref<128x256xbf16, #tpu.memory_space<vmem>>, vector<128x256xbf16>
    %cst_8 = arith.constant dense<0.000000e+00> : vector<16x256xf32>
    %11 = tpu.matmul %9, %10, %cst_8 {dimension_numbers = #tpu.dot_dimension_numbers<[1], [0], [0], [1], [0, 0, 1, 1], [], []>} : vector<16x128xbf16>, vector<128x256xbf16>, vector<16x256xf32> -> vector<16x256xf32>
    %c0_9 = arith.constant 0 : index
    %c0_10 = arith.constant 0 : index
    %12 = vector.load %arg5[%c0_9, %c0_10] : memref<1x256xf32, #tpu.memory_space<vmem>>, vector<1x256xf32>
    %13 = vector.broadcast %12 : vector<1x256xf32> to vector<16x256xf32>
    %14 = arith.addf %11, %13 : vector<16x256xf32>
    %cst_11 = arith.constant 0.000000e+00 : f32
    %15 = vector.broadcast %cst_11 : f32 to vector<16x256xf32>
    %16 = arith.maximumf %14, %15 : vector<16x256xf32>
    %17 = arith.truncf %16 : vector<16x256xf32> to vector<16x256xbf16>
    %c0_12 = arith.constant 0 : index
    %c0_13 = arith.constant 0 : index
    %18 = vector.load %arg6[%c0_12, %c0_13] : memref<256x128xbf16, #tpu.memory_space<vmem>>, vector<256x128xbf16>
    %cst_14 = arith.constant dense<0.000000e+00> : vector<16x128xf32>
    %19 = tpu.matmul %17, %18, %cst_14 {dimension_numbers = #tpu.dot_dimension_numbers<[1], [0], [0], [1], [0, 0, 1, 1], [], []>} : vector<16x256xbf16>, vector<256x128xbf16>, vector<16x128xf32> -> vector<16x128xf32>
    %c0_15 = arith.constant 0 : index
    %c0_16 = arith.constant 0 : index
    %20 = vector.load %arg7[%c0_15, %c0_16] : memref<1x128xf32, #tpu.memory_space<vmem>>, vector<1x128xf32>
    %21 = vector.broadcast %20 : vector<1x128xf32> to vector<16x128xf32>
    %22 = arith.addf %19, %21 : vector<16x128xf32>
    %23 = arith.truncf %22 : vector<16x128xf32> to vector<16x128xbf16>
    %c0_17 = arith.constant 0 : index
    %c0_18 = arith.constant 0 : index
    %24 = vector.load %arg8[%c0_17, %c0_18] : memref<16x128xbf16, #tpu.memory_space<vmem>>, vector<16x128xbf16>
    tpu.vector_store %arg8[%c0_17, %c0_18], %23 {strides = array<i32>} : memref<16x128xbf16, #tpu.memory_space<vmem>>, vector<16x128xbf16>,
    return
  }
  func.func @transform_0(%arg0: i32) -> (i32, i32) {
    %c0_i32 = arith.constant 0 : i32
    %c0_i32_0 = arith.constant 0 : i32
    return %arg0, %c0_i32 : i32, i32
  }
  func.func @transform_1(%arg0: i32) -> (i32, i32) {
    %c0_i32 = arith.constant 0 : i32
    %c0_i32_0 = arith.constant 0 : i32
    %c0_i32_1 = arith.constant 0 : i32
    return %c0_i32, %c0_i32_0 : i32, i32
  }
  func.func @transform_2(%arg0: i32) -> (i32, i32) {
    %c0_i32 = arith.constant 0 : i32
    %c0_i32_0 = arith.constant 0 : i32
    %c0_i32_1 = arith.constant 0 : i32
    return %c0_i32, %c0_i32_0 : i32, i32
  }
  func.func @transform_3(%arg0: i32) -> (i32, i32) {
    %c0_i32 = arith.constant 0 : i32
    %c0_i32_0 = arith.constant 0 : i32
    %c0_i32_1 = arith.constant 0 : i32
    return %c0_i32, %c0_i32_0 : i32, i32
  }
  func.func @transform_4(%arg0: i32) -> (i32, i32) {
    %c0_i32 = arith.constant 0 : i32
    %c0_i32_0 = arith.constant 0 : i32
    %c0_i32_1 = arith.constant 0 : i32
    return %c0_i32, %c0_i32_0 : i32, i32
  }
  func.func @transform_5(%arg0: i32) -> (i32, i32) {
    %c0_i32 = arith.constant 0 : i32
    %c0_i32_0 = arith.constant 0 : i32
    %c0_i32_1 = arith.constant 0 : i32
    return %c0_i32, %c0_i32_0 : i32, i32
  }
  func.func @transform_6(%arg0: i32) -> (i32, i32) {
    %c0_i32 = arith.constant 0 : i32
    %c0_i32_0 = arith.constant 0 : i32
    %c0_i32_1 = arith.constant 0 : i32
    return %c0_i32, %c0_i32_0 : i32, i32
  }
  func.func @transform_7(%arg0: i32) -> (i32, i32) {
    %c0_i32 = arith.constant 0 : i32
    %c0_i32_0 = arith.constant 0 : i32
    return %arg0, %c0_i32 : i32, i32
  }
}

</mosaic_0001>

<llo_original>
// kernel: tpu_custom_call.1
$region0: #{tpu_custom_call.1}
  #allocation0 [shape = 'u32[]', space=smem, size = 0x4, offset = 0x4, fixed_abs, tag = 'smem constant byte address 0x4 - core index']
  #allocation1 [shape = 'u32[72,128]{1,0:T(1,128)}', space=vmem, size = 0x9000, scoped, tag = 'internal scratch']
  %s0 = inlined_call_operand.hbm [shape: f32[32,784], index: 0, kind: input, shape index: {}]
  %s1 = inlined_call_operand.hbm [shape: bf16[784,128], index: 1, kind: input, shape index: {}]
  %s2 = inlined_call_operand.vmem [shape: f32[1,128], index: 2, kind: input, shape index: {}]
  %s3 = inlined_call_operand.hbm [shape: bf16[128,256], index: 3, kind: input, shape index: {}]
  %s4 = inlined_call_operand.vmem [shape: f32[1,256], index: 4, kind: input, shape index: {}]
  %s5 = inlined_call_operand.hbm [shape: bf16[256,128], index: 5, kind: input, shape index: {}]
  %s6 = inlined_call_operand.vmem [shape: f32[1,128], index: 6, kind: input, shape index: {}]
  %s7 = inlined_call_operand.hbm [shape: bf16[32,128], index: 7, kind: output, shape index: {}]
  %s8 = sld [smem:[#allocation0]]
  $region77: #{tpu_custom_call.1} parent=0
    _
  %s10 = ssub.s32 1, %s8
  %s11 = scalar_select 0, %s10, %s8
  $region1: #{tpu_custom_call.1} parent=0
    #allocation2 [shape = 'u8[114688]{0}', space=vmem, size = 0x1c000, scoped, tag = 'input window, operand 0']
    #allocation3 [shape = 's32[2]{0}', space=sflag, size = 0x8, scoped, tag = 'scoped memory for tpu_custom_call.1']
    #allocation4 [shape = 's32[2]{0}', space=sflag, size = 0x8, scoped, tag = 'scoped memory for tpu_custom_call.1']
    #allocation5 [shape = 'u8[200704]{0}', space=vmem, size = 0x31000, scoped, tag = 'input window, operand 1, single buffered']
    #allocation6 [shape = 's32[1]{0}', space=sflag, size = 0x4, scoped, tag = 'scoped memory for tpu_custom_call.1']
    #allocation7 [shape = 'u8[65536]{0}', space=vmem, size = 0x10000, scoped, tag = 'input window, operand 3, single buffered']
    #allocation8 [shape = 'u8[65536]{0}', space=vmem, size = 0x10000, scoped, tag = 'input window, operand 5, single buffered']
    #allocation9 [shape = 's32[1]{0}', space=sflag, size = 0x4, scoped, tag = 'scoped memory for tpu_custom_call.1']
    #allocation10 [shape = 'u8[8192]{0}', space=vmem, size = 0x2000, scoped, tag = 'output window, operand 0']
    %12 = vsyncpa [#allocation3], 0
    %s13 = scalar_lea.sflag [#allocation3], 1
    %14 = vsyncpa %s13, 0
    %15 = vsyncpa [#allocation6], 0
    %16 = vsyncpa [#allocation9], 0
    %17 = vsyncpa [#allocation4], 0
    %s18 = scalar_lea.sflag [#allocation4], 1
    %19 = vsyncpa %s18, 0
    loop: start=0, step=1, limit=4
    $region2: #{tpu_custom_call.1} parent=1 // loop_pre_header
      _
    $region3: #{tpu_custom_call.1} parent=1 // loop_header
      %s21 = sphi 0, %s25
      %p22 = scmp.ge.s32.totalorder %s21, 4
      %s31 = sphi 0, %s33
      %s34 = sphi 0, %s31
      %s35 = sphi 0, %s34
      %s51 = sphi 0, %s35
      %s55 = sphi 0, %s55
      %s57 = sphi 0, %s55
      %s58 = sphi 0, %s57
      %s72 = sphi 0, %s58
      %s76 = sphi 0, %s76
      %s78 = sphi 0, %s76
      %s79 = sphi 0, %s78
      %s93 = sphi 0, %s79
      %s97 = sphi 0, %s97
      %s99 = sphi 0, %s97
      %s100 = sphi 0, %s99
      %s114 = sphi 0, %s100
      %s118 = sphi 0, %s118
      %s120 = sphi 0, %s118
      %s121 = sphi 0, %s120
      %s135 = sphi 0, %s121
      %s139 = sphi 0, %s139
      %s141 = sphi 0, %s139
      %s142 = sphi 0, %s141
      %s156 = sphi 0, %s142
      %s160 = sphi 0, %s160
      %s162 = sphi 0, %s160
      %s163 = sphi 0, %s162
      %s177 = sphi 0, %s163
      %s183 = sphi 0, %s185
      %s186 = sphi 0, %s183
      %s187 = sphi 0, %s186
      %s203 = sphi 0, %s187
    $region4: #{tpu_custom_call.1} parent=1 // loop_header_branch
      %24 = sbr.rel (%p22) target = $region8
    $region5: #{tpu_custom_call.1} parent=1 // loop_body
      %s26 = ssub.s32 %s21, 1
      %s27 = ssub.s32 %s21, 2
      %s28 = sadd.s32 %s21, 1
      %s29 = ssub.s32 %s21, %s28
      %p30 = scmp.eq.s32.totalorder %s29, 0
      %s32 = sadd.s32 %s31, 1
      %s33 = scalar_select %p30, %s31, %s32
      %p36 = pneg %p30
      %p37 = scmp.eq.s32.totalorder %s21, 1
      %p38 = por %p36, %p37
      %p39 = scmp.ne.s32.totalorder %s31, %s34
      %p40 = scmp.eq.s32.totalorder %s21, 0
      %p41 = por %p39, %p40
      %p42 = scmp.ne.s32.totalorder %s31, %s34
      %p43 = scmp.eq.s32.totalorder %s26, 1
      %p44 = por %p42, %p43
      %p45 = scmp.ne.s32.totalorder %s34, %s35
      %p46 = scmp.eq.s32.totalorder %s26, 0
      %p47 = por %p45, %p46
      %p48 = scmp.ne.s32.totalorder %s34, %s35
      %p49 = scmp.eq.s32.totalorder %s27, 1
      %p50 = por %p48, %p49
      %p52 = scmp.ne.s32.totalorder %s35, %s51
      %p53 = scmp.eq.s32.totalorder %s27, 0
      %p54 = por %p52, %p53
      %s56 = sadd.s32 %s55, 1
      %p59 = scmp.eq.s32.totalorder %s21, 1
      %p60 = scmp.ne.s32.totalorder %s55, %s57
      %p61 = scmp.eq.s32.totalorder %s21, 0
      %p62 = por %p60, %p61
      %p63 = scmp.ne.s32.totalorder %s55, %s57
      %p64 = scmp.eq.s32.totalorder %s26, 1
      %p65 = por %p63, %p64
      %p66 = scmp.ne.s32.totalorder %s57, %s58
      %p67 = scmp.eq.s32.totalorder %s26, 0
      %p68 = por %p66, %p67
      %p69 = scmp.ne.s32.totalorder %s57, %s58
      %p70 = scmp.eq.s32.totalorder %s27, 1
      %p71 = por %p69, %p70
      %p73 = scmp.ne.s32.totalorder %s58, %s72
      %p74 = scmp.eq.s32.totalorder %s27, 0
      %p75 = por %p73, %p74
      %s77 = sadd.s32 %s76, 1
      %p80 = scmp.eq.s32.totalorder %s21, 1
      %p81 = scmp.ne.s32.totalorder %s76, %s78
      %p82 = scmp.eq.s32.totalorder %s21, 0
      %p83 = por %p81, %p82
      %p84 = scmp.ne.s32.totalorder %s76, %s78
      %p85 = scmp.eq.s32.totalorder %s26, 1
      %p86 = por %p84, %p85
      %p87 = scmp.ne.s32.totalorder %s78, %s79
      %p88 = scmp.eq.s32.totalorder %s26, 0
      %p89 = por %p87, %p88
      %p90 = scmp.ne.s32.totalorder %s78, %s79
      %p91 = scmp.eq.s32.totalorder %s27, 1
      %p92 = por %p90, %p91
      %p94 = scmp.ne.s32.totalorder %s79, %s93
      %p95 = scmp.eq.s32.totalorder %s27, 0
      %p96 = por %p94, %p95
      %s98 = sadd.s32 %s97, 1
      %p101 = scmp.eq.s32.totalorder %s21, 1
      %p102 = scmp.ne.s32.totalorder %s97, %s99
      %p103 = scmp.eq.s32.totalorder %s21, 0
      %p104 = por %p102, %p103
      %p105 = scmp.ne.s32.totalorder %s97, %s99
      %p106 = scmp.eq.s32.totalorder %s26, 1
      %p107 = por %p105, %p106
      %p108 = scmp.ne.s32.totalorder %s99, %s100
      %p109 = scmp.eq.s32.totalorder %s26, 0
      %p110 = por %p108, %p109
      %p111 = scmp.ne.s32.totalorder %s99, %s100
      %p112 = scmp.eq.s32.totalorder %s27, 1
      %p113 = por %p111, %p112
      %p115 = scmp.ne.s32.totalorder %s100, %s114
      %p116 = scmp.eq.s32.totalorder %s27, 0
      %p117 = por %p115, %p116
      %s119 = sadd.s32 %s118, 1
      %p122 = scmp.eq.s32.totalorder %s21, 1
      %p123 = scmp.ne.s32.totalorder %s118, %s120
      %p124 = scmp.eq.s32.totalorder %s21, 0
      %p125 = por %p123, %p124
      %p126 = scmp.ne.s32.totalorder %s118, %s120
      %p127 = scmp.eq.s32.totalorder %s26, 1
      %p128 = por %p126, %p127
      %p129 = scmp.ne.s32.totalorder %s120, %s121
      %p130 = scmp.eq.s32.totalorder %s26, 0
      %p131 = por %p129, %p130
      %p132 = scmp.ne.s32.totalorder %s120, %s121
      %p133 = scmp.eq.s32.totalorder %s27, 1
      %p134 = por %p132, %p133
      %p136 = scmp.ne.s32.totalorder %s121, %s135
      %p137 = scmp.eq.s32.totalorder %s27, 0
      %p138 = por %p136, %p137
      %s140 = sadd.s32 %s139, 1
      %p143 = scmp.eq.s32.totalorder %s21, 1
      %p144 = scmp.ne.s32.totalorder %s139, %s141
      %p145 = scmp.eq.s32.totalorder %s21, 0
      %p146 = por %p144, %p145
      %p147 = scmp.ne.s32.totalorder %s139, %s141
      %p148 = scmp.eq.s32.totalorder %s26, 1
      %p149 = por %p147, %p148
      %p150 = scmp.ne.s32.totalorder %s141, %s142
      %p151 = scmp.eq.s32.totalorder %s26, 0
      %p152 = por %p150, %p151
      %p153 = scmp.ne.s32.totalorder %s141, %s142
      %p154 = scmp.eq.s32.totalorder %s27, 1
      %p155 = por %p153, %p154
      %p157 = scmp.ne.s32.totalorder %s142, %s156
      %p158 = scmp.eq.s32.totalorder %s27, 0
      %p159 = por %p157, %p158
      %s161 = sadd.s32 %s160, 1
      %p164 = scmp.eq.s32.totalorder %s21, 1
      %p165 = scmp.ne.s32.totalorder %s160, %s162
      %p166 = scmp.eq.s32.totalorder %s21, 0
      %p167 = por %p165, %p166
      %p168 = scmp.ne.s32.totalorder %s160, %s162
      %p169 = scmp.eq.s32.totalorder %s26, 1
      %p170 = por %p168, %p169
      %p171 = scmp.ne.s32.totalorder %s162, %s163
      %p172 = scmp.eq.s32.totalorder %s26, 0
      %p173 = por %p171, %p172
      %p174 = scmp.ne.s32.totalorder %s162, %s163
      %p175 = scmp.eq.s32.totalorder %s27, 1
      %p176 = por %p174, %p175
      %p178 = scmp.ne.s32.totalorder %s163, %s177
      %p179 = scmp.eq.s32.totalorder %s27, 0
      %p180 = por %p178, %p179
      %s181 = ssub.s32 %s21, %s28
      %p182 = scmp.eq.s32.totalorder %s181, 0
      %s184 = sadd.s32 %s183, 1
      %s185 = scalar_select %p182, %s183, %s184
      %p188 = pneg %p182
      %p189 = scmp.eq.s32.totalorder %s21, 1
      %p190 = por %p188, %p189
      %p191 = scmp.ne.s32.totalorder %s183, %s186
      %p192 = scmp.eq.s32.totalorder %s21, 0
      %p193 = por %p191, %p192
      %p194 = scmp.ne.s32.totalorder %s183, %s186
      %p195 = scmp.eq.s32.totalorder %s26, 1
      %p196 = por %p194, %p195
      %p197 = scmp.ne.s32.totalorder %s186, %s187
      %p198 = scmp.eq.s32.totalorder %s26, 0
      %p199 = por %p197, %p198
      %p200 = scmp.ne.s32.totalorder %s186, %s187
      %p201 = scmp.eq.s32.totalorder %s27, 1
      %p202 = por %p200, %p201
      %p204 = scmp.ne.s32.totalorder %s187, %s203
      %p205 = scmp.eq.s32.totalorder %s27, 0
      %p206 = por %p204, %p205
      %p207 = scmp.le.s32.totalorder 1, %s21
      %p208 = scmp.lt.s32.totalorder %s21, 3
      %p209 = pnand %p207, %p208
      %p210 = pneg %p209
      // Predicated region
      $region9: #{tpu_custom_call.1} parent=5 // pred_check
        _
      $region10: #{tpu_custom_call.1} parent=5 // pred_check_branch
        %212 = sbr.rel (%p209) target = $region12
      $region11: #{tpu_custom_call.1} parent=5 // pred_region
        %s213 = ssub.s32 %s21, 1
        // Predicated region
        $region13: #{tpu_custom_call.1} parent=11 // pred_check
          %p214 = pneg %p68
        $region14: #{tpu_custom_call.1} parent=11 // pred_check_branch
          %216 = sbr.rel (%p214) target = $region16
        $region15: #{tpu_custom_call.1} parent=11 // pred_region
          %218 = vsyncadd [#allocation6], 0
          %s219 = sshll.u32 %s1, 4
          %s220 = int_to_ptr.hbm [resolvable:$true] %s219
          %s221 = sshll.u32 [#allocation5], 4
          %s222 = int_to_ptr.vmem [resolvable:$true] %s221
          %227 = dma.hbm_to_vmem [thread:$0]  %s220, 6272, %s222, [#allocation6], 64, 64, 4
        $region16: #{tpu_custom_call.1} parent=11 // pred_fallthru
          _
        // Predicated region
        $region17: #{tpu_custom_call.1} parent=11 // pred_check
          %p228 = pneg %p89
        $region18: #{tpu_custom_call.1} parent=11 // pred_check_branch
          %230 = sbr.rel (%p228) target = $region20
        $region19: #{tpu_custom_call.1} parent=11 // pred_region
          _
        $region20: #{tpu_custom_call.1} parent=11 // pred_fallthru
          _
        // Predicated region
        $region21: #{tpu_custom_call.1} parent=11 // pred_check
          %p231 = pneg %p110
        $region22: #{tpu_custom_call.1} parent=11 // pred_check_branch
          %233 = sbr.rel (%p231) target = $region24
        $region23: #{tpu_custom_call.1} parent=11 // pred_region
          %235 = vsyncadd [#allocation6], 0
          %s236 = sshll.u32 %s3, 4
          %s237 = int_to_ptr.hbm [resolvable:$true] %s236
          %s238 = sshll.u32 [#allocation7], 4
          %s239 = int_to_ptr.vmem [resolvable:$true] %s238
          %244 = dma.hbm_to_vmem [thread:$0]  %s237, 2048, %s239, [#allocation6], 128, 128, 8
        $region24: #{tpu_custom_call.1} parent=11 // pred_fallthru
          _
        // Predicated region
        $region25: #{tpu_custom_call.1} parent=11 // pred_check
          %p245 = pneg %p131
        $region26: #{tpu_custom_call.1} parent=11 // pred_check_branch
          %247 = sbr.rel (%p245) target = $region28
        $region27: #{tpu_custom_call.1} parent=11 // pred_region
          _
        $region28: #{tpu_custom_call.1} parent=11 // pred_fallthru
          _
        // Predicated region
        $region29: #{tpu_custom_call.1} parent=11 // pred_check
          %p248 = pneg %p152
        $region30: #{tpu_custom_call.1} parent=11 // pred_check_branch
          %250 = sbr.rel (%p248) target = $region32
        $region31: #{tpu_custom_call.1} parent=11 // pred_region
          %252 = vsyncadd [#allocation9], 0
          %s253 = sshll.u32 %s5, 4
          %s254 = int_to_ptr.hbm [resolvable:$true] %s253
          %s255 = sshll.u32 [#allocation8], 4
          %s256 = int_to_ptr.vmem [resolvable:$true] %s255
          %261 = dma.hbm_to_vmem [thread:$0]  %s254, 2048, %s256, [#allocation9], 64, 64, 4
        $region32: #{tpu_custom_call.1} parent=11 // pred_fallthru
          _
        // Predicated region
        $region33: #{tpu_custom_call.1} parent=11 // pred_check
          %p262 = pneg %p173
        $region34: #{tpu_custom_call.1} parent=11 // pred_check_branch
          %264 = sbr.rel (%p262) target = $region36
        $region35: #{tpu_custom_call.1} parent=11 // pred_region
          _
        $region36: #{tpu_custom_call.1} parent=11 // pred_fallthru
          _
      $region12: #{tpu_custom_call.1} parent=5 // pred_fallthru
        _
      %p265 = scmp.lt.s32.totalorder %s21, 2
      // Predicated region
      $region37: #{tpu_custom_call.1} parent=5 // pred_check
        %p266 = pneg %p265
      $region38: #{tpu_custom_call.1} parent=5 // pred_check_branch
        %268 = sbr.rel (%p266) target = $region40
      $region39: #{tpu_custom_call.1} parent=5 // pred_region
        // Predicated region
        $region41: #{tpu_custom_call.1} parent=39 // pred_check
          %p269 = pneg %p41
        $region42: #{tpu_custom_call.1} parent=39 // pred_check_branch
          %271 = sbr.rel (%p269) target = $region44
        $region43: #{tpu_custom_call.1} parent=39 // pred_region
          %s272 = sand.u32 %s31, 1
          %s273 = scalar_lea.sflag [#allocation3], %s272
          %s274 = sand.u32 %s31, 1
          %s275 = smul.addr %s274, 112
          %s276 = scalar_lea.vmem [#allocation2], %s275
          %s277 = smul.u32 2, %s21
          %279 = vsyncadd %s273, 0
          %s280 = smul.addr %s277, 7
          %s281 = smul.addr %s280, 8
          %s282 = scalar_lea.hbm %s0, %s281
          %s283 = sshll.u32 %s282, 4
          %s284 = int_to_ptr.hbm [resolvable:$true] %s283
          %s285 = sshll.u32 %s276, 4
          %s286 = int_to_ptr.vmem [resolvable:$true] %s285
          %291 = dma.hbm_to_vmem [thread:$0]  %s284, 1792, %s286, %s273, 896, 896, 56
        $region44: #{tpu_custom_call.1} parent=39 // pred_fallthru
          _
      $region40: #{tpu_custom_call.1} parent=5 // pred_fallthru
        _
      %p292 = scmp.le.s32.totalorder 1, %s21
      %p293 = scmp.lt.s32.totalorder %s21, 3
      %p294 = pnand %p292, %p293
      %p295 = pneg %p294
      // Predicated region
      $region45: #{tpu_custom_call.1} parent=5 // pred_check
        _
      $region46: #{tpu_custom_call.1} parent=5 // pred_check_branch
        %297 = sbr.rel (%p294) target = $region48
      $region47: #{tpu_custom_call.1} parent=5 // pred_region
        %s298 = ssub.s32 %s21, 1
        %s299 = sand.u32 %s34, 1
        %s300 = scalar_lea.sflag [#allocation3], %s299
        %s301 = sand.u32 %s34, 1
        %s302 = smul.addr %s301, 112
        %s303 = scalar_lea.vmem [#allocation2], %s302
        // Predicated region
        $region49: #{tpu_custom_call.1} parent=47 // pred_check
          %p304 = pneg %p47
        $region50: #{tpu_custom_call.1} parent=47 // pred_check_branch
          %306 = sbr.rel (%p304) target = $region52
        $region51: #{tpu_custom_call.1} parent=47 // pred_region
          %308 = dma.done %s300, 1792
        $region52: #{tpu_custom_call.1} parent=47 // pred_fallthru
          _
        // Predicated region
        $region53: #{tpu_custom_call.1} parent=47 // pred_check
          %p309 = pneg %p68
        $region54: #{tpu_custom_call.1} parent=47 // pred_check_branch
          %311 = sbr.rel (%p309) target = $region56
        $region55: #{tpu_custom_call.1} parent=47 // pred_region
          %313 = dma.done [#allocation6], 6272
        $region56: #{tpu_custom_call.1} parent=47 // pred_fallthru
          _
        // Predicated region
        $region57: #{tpu_custom_call.1} parent=47 // pred_check
          %p314 = pneg %p110
        $region58: #{tpu_custom_call.1} parent=47 // pred_check_branch
          %316 = sbr.rel (%p314) target = $region60
        $region59: #{tpu_custom_call.1} parent=47 // pred_region
          %318 = dma.done [#allocation6], 2048
        $region60: #{tpu_custom_call.1} parent=47 // pred_fallthru
          _
        // Predicated region
        $region61: #{tpu_custom_call.1} parent=47 // pred_check
          %p319 = pneg %p152
        $region62: #{tpu_custom_call.1} parent=47 // pred_check_branch
          %321 = sbr.rel (%p319) target = $region64
        $region63: #{tpu_custom_call.1} parent=47 // pred_region
          %323 = dma.done [#allocation9], 2048
        $region64: #{tpu_custom_call.1} parent=47 // pred_fallthru
          _
        %s324 = sand.u32 %s34, 1
        %s325 = scalar_lea.sflag [#allocation3], %s324
        %s326 = sand.u32 %s34, 1
        %s327 = smul.addr %s326, 112
        %s328 = scalar_lea.vmem [#allocation2], %s327
        %p329 = pneg %p47
        %p330 = pneg %p44
        %p331 = pneg %p68
        %p332 = pneg %p65
        %p333 = pneg %p89
        %p334 = pneg %p86
        %p335 = pneg %p110
        %p336 = pneg %p107
        %p337 = pneg %p131
        %p338 = pneg %p128
        %p339 = pneg %p152
        %p340 = pneg %p149
        %p341 = pneg %p173
        %p342 = pneg %p170
        %p343 = pneg %p199
        %p344 = pneg %p196
        %s345 = sand.u32 %s186, 1
        %s346 = scalar_lea.sflag [#allocation4], %s345
        %s347 = sand.u32 %s186, 1
        %s348 = smul.addr %s347, 8
        %s349 = scalar_lea.vmem [#allocation10], %s348
        %s350 = smul.u32 2, %s26
        %s351 = smul.u32 2, %s26
        %v353 = vld [vmem:[%s303] sm:$0xff]
        %v354 = vld [vmem:[%s303 + $0x8] sm:$0xff]
        %v355 = vld [vmem:[%s303 + $0x10] sm:$0xff]
        %v356 = vld [vmem:[%s303 + $0x18] sm:$0xff]
        %v357 = vld [vmem:[%s303 + $0x20] sm:$0xff]
        %v358 = vld [vmem:[%s303 + $0x28] sm:$0xff]
        %v359 = vld [vmem:[%s303 + $0x30] sm:$0xff]
        %v360 = vld [vmem:[%s303 + $0x38] sm:$0xff]
        %v361 = vld [vmem:[%s303 + $0x40] sm:$0xff]
        %v362 = vld [vmem:[%s303 + $0x48] sm:$0xff]
        %v363 = vld [vmem:[%s303 + $0x50] sm:$0xff]
        %v364 = vld [vmem:[%s303 + $0x58] sm:$0xff]
        %v365 = vld [vmem:[%s303 + $0x60] sm:$0xff]
        %v366 = vld [vmem:[%s303 + $0x68] sm:$0xff]
        %v367 = vpack.c.bf16 %v360, %v353
        %v368 = vpack.c.bf16 %v361, %v354
        %v369 = vpack.c.bf16 %v362, %v355
        %v370 = vpack.c.bf16 %v363, %v356
        %v371 = vpack.c.bf16 %v364, %v357
        %v372 = vpack.c.bf16 %v365, %v358
        %v373 = vpack.c.bf16 %v366, %v359
        %v374 = vld [vmem:[#allocation5] sm:$0xf]
        %v375 = vld [vmem:[#allocation5 + $0x4] sm:$0xf]
        %v376 = vld [vmem:[#allocation5 + $0x8] sm:$0xf]
        %v377 = vld [vmem:[#allocation5 + $0xc] sm:$0xf]
        %v378 = vld [vmem:[#allocation5 + $0x10] sm:$0xf]
        %v379 = vld [vmem:[#allocation5 + $0x14] sm:$0xf]
        %v380 = vld [vmem:[#allocation5 + $0x18] sm:$0xf]
        %v381 = vld [vmem:[#allocation5 + $0x1c] sm:$0xf]
        %v382 = vld [vmem:[#allocation5 + $0x20] sm:$0xf]
        %v383 = vld [vmem:[#allocation5 + $0x24] sm:$0xf]
        %v384 = vld [vmem:[#allocation5 + $0x28] sm:$0xf]
        %v385 = vld [vmem:[#allocation5 + $0x2c] sm:$0xf]
        %v386 = vld [vmem:[#allocation5 + $0x30] sm:$0xf]
        %v387 = vld [vmem:[#allocation5 + $0x34] sm:$0xf]
        %v388 = vld [vmem:[#allocation5 + $0x38] sm:$0xf]
        %v389 = vld [vmem:[#allocation5 + $0x3c] sm:$0xf]
        %v390 = vld [vmem:[#allocation5 + $0x40] sm:$0xf]
        %v391 = vld [vmem:[#allocation5 + $0x44] sm:$0xf]
        %v392 = vld [vmem:[#allocation5 + $0x48] sm:$0xf]
        %v393 = vld [vmem:[#allocation5 + $0x4c] sm:$0xf]
        %v394 = vld [vmem:[#allocation5 + $0x50] sm:$0xf]
        %v395 = vld [vmem:[#allocation5 + $0x54] sm:$0xf]
        %v396 = vld [vmem:[#allocation5 + $0x58] sm:$0xf]
        %v397 = vld [vmem:[#allocation5 + $0x5c] sm:$0xf]
        %v398 = vld [vmem:[#allocation5 + $0x60] sm:$0xf]
        %v399 = vld [vmem:[#allocation5 + $0x64] sm:$0xf]
        %v400 = vld [vmem:[#allocation5 + $0x68] sm:$0xf]
        %v401 = vld [vmem:[#allocation5 + $0x6c] sm:$0xf]
        %v402 = vld [vmem:[#allocation5 + $0x70] sm:$0xf]
        %v403 = vld [vmem:[#allocation5 + $0x74] sm:$0xf]
        %v404 = vld [vmem:[#allocation5 + $0x78] sm:$0xf]
        %v405 = vld [vmem:[#allocation5 + $0x7c] sm:$0xf]
        %v406 = vld [vmem:[#allocation5 + $0x80] sm:$0xf]
        %v407 = vld [vmem:[#allocation5 + $0x84] sm:$0xf]
        %v408 = vld [vmem:[#allocation5 + $0x88] sm:$0xf]
        %v409 = vld [vmem:[#allocation5 + $0x8c] sm:$0xf]
        %v410 = vld [vmem:[#allocation5 + $0x90] sm:$0xf]
        %v411 = vld [vmem:[#allocation5 + $0x94] sm:$0xf]
        %v412 = vld [vmem:[#allocation5 + $0x98] sm:$0xf]
        %v413 = vld [vmem:[#allocation5 + $0x9c] sm:$0xf]
        %v414 = vld [vmem:[#allocation5 + $0xa0] sm:$0xf]
        %v415 = vld [vmem:[#allocation5 + $0xa4] sm:$0xf]
        %v416 = vld [vmem:[#allocation5 + $0xa8] sm:$0xf]
        %v417 = vld [vmem:[#allocation5 + $0xac] sm:$0xf]
        %v418 = vld [vmem:[#allocation5 + $0xb0] sm:$0xf]
        %v419 = vld [vmem:[#allocation5 + $0xb4] sm:$0xf]
        %v420 = vld [vmem:[#allocation5 + $0xb8] sm:$0xf]
        %v421 = vld [vmem:[#allocation5 + $0xbc] sm:$0xf]
        %v422 = vld [vmem:[#allocation5 + $0xc0] sm:$0xf]
        %v423 = vld [vmem:[#allocation5 + $0xc4] sm:$0xf]
        %v424 = vld [vmem:[#allocation5 + $0xc8] sm:$0xf]
        %v425 = vld [vmem:[#allocation5 + $0xcc] sm:$0xf]
        %v426 = vld [vmem:[#allocation5 + $0xd0] sm:$0xf]
        %v427 = vld [vmem:[#allocation5 + $0xd4] sm:$0xf]
        %v428 = vld [vmem:[#allocation5 + $0xd8] sm:$0xf]
        %v429 = vld [vmem:[#allocation5 + $0xdc] sm:$0xf]
        %v430 = vld [vmem:[#allocation5 + $0xe0] sm:$0xf]
        %v431 = vld [vmem:[#allocation5 + $0xe4] sm:$0xf]
        %v432 = vld [vmem:[#allocation5 + $0xe8] sm:$0xf]
        %v433 = vld [vmem:[#allocation5 + $0xec] sm:$0xf]
        %v434 = vld [vmem:[#allocation5 + $0xf0] sm:$0xf]
        %v435 = vld [vmem:[#allocation5 + $0xf4] sm:$0xf]
        %v436 = vld [vmem:[#allocation5 + $0xf8] sm:$0xf]
        %v437 = vld [vmem:[#allocation5 + $0xfc] sm:$0xf]
        %v438 = vld [vmem:[#allocation5 + $0x100] sm:$0xf]
        %v439 = vld [vmem:[#allocation5 + $0x104] sm:$0xf]
        %v440 = vld [vmem:[#allocation5 + $0x108] sm:$0xf]
        %v441 = vld [vmem:[#allocation5 + $0x10c] sm:$0xf]
        %v442 = vld [vmem:[#allocation5 + $0x110] sm:$0xf]
        %v443 = vld [vmem:[#allocation5 + $0x114] sm:$0xf]
        %v444 = vld [vmem:[#allocation5 + $0x118] sm:$0xf]
        %v445 = vld [vmem:[#allocation5 + $0x11c] sm:$0xf]
        %v446 = vld [vmem:[#allocation5 + $0x120] sm:$0xf]
        %v447 = vld [vmem:[#allocation5 + $0x124] sm:$0xf]
        %v448 = vld [vmem:[#allocation5 + $0x128] sm:$0xf]
        %v449 = vld [vmem:[#allocation5 + $0x12c] sm:$0xf]
        %v450 = vld [vmem:[#allocation5 + $0x130] sm:$0xf]
        %v451 = vld [vmem:[#allocation5 + $0x134] sm:$0xf]
        %v452 = vld [vmem:[#allocation5 + $0x138] sm:$0xf]
        %v453 = vld [vmem:[#allocation5 + $0x13c] sm:$0xf]
        %v454 = vld [vmem:[#allocation5 + $0x140] sm:$0xf]
        %v455 = vld [vmem:[#allocation5 + $0x144] sm:$0xf]
        %v456 = vld [vmem:[#allocation5 + $0x148] sm:$0xf]
        %v457 = vld [vmem:[#allocation5 + $0x14c] sm:$0xf]
        %v458 = vld [vmem:[#allocation5 + $0x150] sm:$0xf]
        %v459 = vld [vmem:[#allocation5 + $0x154] sm:$0xf]
        %v460 = vld [vmem:[#allocation5 + $0x158] sm:$0xf]
        %v461 = vld [vmem:[#allocation5 + $0x15c] sm:$0xf]
        %v462 = vld [vmem:[#allocation5 + $0x160] sm:$0xf]
        %v463 = vld [vmem:[#allocation5 + $0x164] sm:$0xf]
        %v464 = vld [vmem:[#allocation5 + $0x168] sm:$0xf]
        %v465 = vld [vmem:[#allocation5 + $0x16c] sm:$0xf]
        %v466 = vld [vmem:[#allocation5 + $0x170] sm:$0xf]
        %v467 = vld [vmem:[#allocation5 + $0x174] sm:$0xf]
        %v468 = vld [vmem:[#allocation5 + $0x178] sm:$0xf]
        %v469 = vld [vmem:[#allocation5 + $0x17c] sm:$0xf]
        %v470 = vld [vmem:[#allocation5 + $0x180] sm:$0xf]
        %v471 = vld [vmem:[#allocation5 + $0x184] sm:$0xf]
        %v472 = vld [vmem:[%s2] sm:$0x1]
        %v474 = vperm.slane %v472, 0
        %v574 = vunpack.c.l.b16 %v374
        %v575 = vunpack.c.l.b16 %v375
        %v576 = vunpack.c.l.b16 %v376
        %v577 = vunpack.c.l.b16 %v377
        %v578 = vunpack.c.l.b16 %v378
        %v579 = vunpack.c.l.b16 %v379
        %v580 = vunpack.c.l.b16 %v380
        %v581 = vunpack.c.l.b16 %v381
        %v582 = vunpack.c.l.b16 %v382
        %v583 = vunpack.c.l.b16 %v383
        %v584 = vunpack.c.l.b16 %v384
        %v585 = vunpack.c.l.b16 %v385
        %v586 = vunpack.c.l.b16 %v386
        %v587 = vunpack.c.l.b16 %v387
        %v588 = vunpack.c.l.b16 %v388
        %v589 = vunpack.c.l.b16 %v389
        %v590 = vunpack.c.l.b16 %v390
        %v591 = vunpack.c.l.b16 %v391
        %v592 = vunpack.c.l.b16 %v392
        %v593 = vunpack.c.l.b16 %v393
        %v594 = vunpack.c.l.b16 %v394
        %v595 = vunpack.c.l.b16 %v395
        %v596 = vunpack.c.l.b16 %v396
        %v597 = vunpack.c.l.b16 %v397
        %v598 = vunpack.c.l.b16 %v398
        %v599 = vunpack.c.l.b16 %v399
        %v600 = vunpack.c.l.b16 %v400
        %v601 = vunpack.c.l.b16 %v401
        %v602 = vunpack.c.l.b16 %v402
        %v603 = vunpack.c.l.b16 %v403
        %v604 = vunpack.c.l.b16 %v404
        %v605 = vunpack.c.l.b16 %v405
        %v606 = vunpack.c.l.b16 %v406
        %v607 = vunpack.c.l.b16 %v407
        %v608 = vunpack.c.l.b16 %v408
        %v609 = vunpack.c.l.b16 %v409
        %v610 = vunpack.c.l.b16 %v410
        %v611 = vunpack.c.l.b16 %v411
        %v612 = vunpack.c.l.b16 %v412
        %v613 = vunpack.c.l.b16 %v413
        %v614 = vunpack.c.l.b16 %v414
        %v615 = vunpack.c.l.b16 %v415
        %v616 = vunpack.c.l.b16 %v416
        %v617 = vunpack.c.l.b16 %v417
        %v618 = vunpack.c.l.b16 %v418
        %v619 = vunpack.c.l.b16 %v419
        %v620 = vunpack.c.l.b16 %v420
        %v621 = vunpack.c.l.b16 %v421
        %v622 = vunpack.c.l.b16 %v422
        %v623 = vunpack.c.l.b16 %v423
        %v624 = vunpack.c.l.b16 %v424
        %v625 = vunpack.c.l.b16 %v425
        %v626 = vunpack.c.l.b16 %v426
        %v627 = vunpack.c.l.b16 %v427
        %v628 = vunpack.c.l.b16 %v428
        %v629 = vunpack.c.l.b16 %v429
        %v630 = vunpack.c.l.b16 %v430
        %v631 = vunpack.c.l.b16 %v431
        %v632 = vunpack.c.l.b16 %v432
        %v633 = vunpack.c.l.b16 %v433
        %v634 = vunpack.c.l.b16 %v434
        %v635 = vunpack.c.l.b16 %v435
        %v636 = vunpack.c.l.b16 %v436
        %v637 = vunpack.c.l.b16 %v437
        %v638 = vunpack.c.l.b16 %v438
        %v639 = vunpack.c.l.b16 %v439
        %v640 = vunpack.c.l.b16 %v440
        %v641 = vunpack.c.l.b16 %v441
        %v642 = vunpack.c.l.b16 %v442
        %v643 = vunpack.c.l.b16 %v443
        %v644 = vunpack.c.l.b16 %v444
        %v645 = vunpack.c.l.b16 %v445
        %v646 = vunpack.c.l.b16 %v446
        %v647 = vunpack.c.l.b16 %v447
        %v648 = vunpack.c.l.b16 %v448
        %v649 = vunpack.c.l.b16 %v449
        %v650 = vunpack.c.l.b16 %v450
        %v651 = vunpack.c.l.b16 %v451
        %v652 = vunpack.c.l.b16 %v452
        %v653 = vunpack.c.l.b16 %v453
        %v654 = vunpack.c.l.b16 %v454
        %v655 = vunpack.c.l.b16 %v455
        %v656 = vunpack.c.l.b16 %v456
        %v657 = vunpack.c.l.b16 %v457
        %v658 = vunpack.c.l.b16 %v458
        %v659 = vunpack.c.l.b16 %v459
        %v660 = vunpack.c.l.b16 %v460
        %v661 = vunpack.c.l.b16 %v461
        %v662 = vunpack.c.l.b16 %v462
        %v663 = vunpack.c.l.b16 %v463
        %v664 = vunpack.c.l.b16 %v464
        %v665 = vunpack.c.l.b16 %v465
        %v666 = vunpack.c.l.b16 %v466
        %v667 = vunpack.c.l.b16 %v467
        %v668 = vunpack.c.l.b16 %v468
        %v669 = vunpack.c.l.b16 %v469
        %v670 = vunpack.c.l.b16 %v470
        %v671 = vunpack.c.l.b16 %v471
        %v672 = vpack.c.b16 %v575, %v574
        %v673 = vpack.c.b16 %v577, %v576
        %v674 = vpack.c.b16 %v579, %v578
        %v675 = vpack.c.b16 %v581, %v580
        %v676 = vpack.c.b16 %v583, %v582
        %v677 = vpack.c.b16 %v585, %v584
        %v678 = vpack.c.b16 %v587, %v586
        %v679 = vpack.c.b16 %v589, %v588
        %v680 = vpack.c.b16 %v591, %v590
        %v681 = vpack.c.b16 %v593, %v592
        %v682 = vpack.c.b16 %v595, %v594
        %v683 = vpack.c.b16 %v597, %v596
        %v684 = vpack.c.b16 %v599, %v598
        %v685 = vpack.c.b16 %v601, %v600
        %v686 = vpack.c.b16 %v603, %v602
        %v687 = vpack.c.b16 %v605, %v604
        %v688 = vpack.c.b16 %v607, %v606
        %v689 = vpack.c.b16 %v609, %v608
        %v690 = vpack.c.b16 %v611, %v610
        %v691 = vpack.c.b16 %v613, %v612
        %v692 = vpack.c.b16 %v615, %v614
        %v693 = vpack.c.b16 %v617, %v616
        %v694 = vpack.c.b16 %v619, %v618
        %v695 = vpack.c.b16 %v621, %v620
        %v696 = vpack.c.b16 %v623, %v622
        %v697 = vpack.c.b16 %v625, %v624
        %v698 = vpack.c.b16 %v627, %v626
        %v699 = vpack.c.b16 %v629, %v628
        %v700 = vpack.c.b16 %v631, %v630
        %v701 = vpack.c.b16 %v633, %v632
        %v702 = vpack.c.b16 %v635, %v634
        %v703 = vpack.c.b16 %v637, %v636
        %v704 = vpack.c.b16 %v639, %v638
        %v705 = vpack.c.b16 %v641, %v640
        %v706 = vpack.c.b16 %v643, %v642
        %v707 = vpack.c.b16 %v645, %v644
        %v708 = vpack.c.b16 %v647, %v646
        %v709 = vpack.c.b16 %v649, %v648
        %v710 = vpack.c.b16 %v651, %v650
        %v711 = vpack.c.b16 %v653, %v652
        %v712 = vpack.c.b16 %v655, %v654
        %v713 = vpack.c.b16 %v657, %v656
        %v714 = vpack.c.b16 %v659, %v658
        %v715 = vpack.c.b16 %v661, %v660
        %v716 = vpack.c.b16 %v663, %v662
        %v717 = vpack.c.b16 %v665, %v664
        %v718 = vpack.c.b16 %v667, %v666
        %v719 = vpack.c.b16 %v669, %v668
        %v720 = vpack.c.b16 %v671, %v670
        %vm770 = vcmask 130048
        %v772 = vsel %vm770, %v373, 0
        %774 = vmatpush.bf16.msra.mxu0 %v679
        %775 = vmatpush.bf16.msra.mxu0 %v678
        %776 = vmatpush.bf16.msra.mxu0 %v677
        %777 = vmatpush.bf16.msra.mxu0 %v676
        %778 = vmatpush.bf16.msra.mxu0 %v675
        %779 = vmatpush.bf16.msra.mxu0 %v674
        %780 = vmatpush.bf16.msra.mxu0 %v673
        %781 = vmatpush.bf16.msra.mxu0 %v672
        %782 = vmatmul.bf16.gmra.mxu0 %v367
        %v783 = vpop.f32.mrf.mxu0
        %v784 = vadd.f32 %v474, %v783
        %v785 = vpop.f32.mrf.mxu0
        %v786 = vadd.f32 %v474, %v785
        %787 = vdwg.mxu0
        %788 = vmatpush.bf16.msra.mxu0 %v687
        %789 = vmatpush.bf16.msra.mxu0 %v686
        %790 = vmatpush.bf16.msra.mxu0 %v685
        %791 = vmatpush.bf16.msra.mxu0 %v684
        %792 = vmatpush.bf16.msra.mxu0 %v683
        %793 = vmatpush.bf16.msra.mxu0 %v682
        %794 = vmatpush.bf16.msra.mxu0 %v681
        %795 = vmatpush.bf16.msra.mxu0 %v680
        %796 = vmatmul.bf16.gmra.mxu0 %v368
        %v797 = vpop.f32.mrf.mxu0
        %v798 = vadd.f32 %v784, %v797
        %v799 = vpop.f32.mrf.mxu0
        %v800 = vadd.f32 %v786, %v799
        %801 = vdwg.mxu0
        %802 = vmatpush.bf16.msra.mxu0 %v695
        %803 = vmatpush.bf16.msra.mxu0 %v694
        %804 = vmatpush.bf16.msra.mxu0 %v693
        %805 = vmatpush.bf16.msra.mxu0 %v692
        %806 = vmatpush.bf16.msra.mxu0 %v691
        %807 = vmatpush.bf16.msra.mxu0 %v690
        %808 = vmatpush.bf16.msra.mxu0 %v689
        %809 = vmatpush.bf16.msra.mxu0 %v688
        %810 = vmatmul.bf16.gmra.mxu0 %v369
        %v811 = vpop.f32.mrf.mxu0
        %v812 = vadd.f32 %v798, %v811
        %v813 = vpop.f32.mrf.mxu0
        %v814 = vadd.f32 %v800, %v813
        %815 = vdwg.mxu0
        %816 = vmatpush.bf16.msra.mxu0 %v703
        %817 = vmatpush.bf16.msra.mxu0 %v702
        %818 = vmatpush.bf16.msra.mxu0 %v701
        %819 = vmatpush.bf16.msra.mxu0 %v700
        %820 = vmatpush.bf16.msra.mxu0 %v699
        %821 = vmatpush.bf16.msra.mxu0 %v698
        %822 = vmatpush.bf16.msra.mxu0 %v697
        %823 = vmatpush.bf16.msra.mxu0 %v696
        %824 = vmatmul.bf16.gmra.mxu0 %v370
        %v825 = vpop.f32.mrf.mxu0
        %v826 = vadd.f32 %v812, %v825
        %v827 = vpop.f32.mrf.mxu0
        %v828 = vadd.f32 %v814, %v827
        %829 = vdwg.mxu0
        %830 = vmatpush.bf16.msra.mxu0 %v711
        %831 = vmatpush.bf16.msra.mxu0 %v710
        %832 = vmatpush.bf16.msra.mxu0 %v709
        %833 = vmatpush.bf16.msra.mxu0 %v708
        %834 = vmatpush.bf16.msra.mxu0 %v707
        %835 = vmatpush.bf16.msra.mxu0 %v706
        %836 = vmatpush.bf16.msra.mxu0 %v705
        %837 = vmatpush.bf16.msra.mxu0 %v704
        %838 = vmatmul.bf16.gmra.mxu0 %v371
        %v839 = vpop.f32.mrf.mxu0
        %v840 = vadd.f32 %v826, %v839
        %v841 = vpop.f32.mrf.mxu0
        %v842 = vadd.f32 %v828, %v841
        %843 = vdwg.mxu0
        %844 = vmatpush.bf16.msra.mxu0 %v719
        %845 = vmatpush.bf16.msra.mxu0 %v718
        %846 = vmatpush.bf16.msra.mxu0 %v717
        %847 = vmatpush.bf16.msra.mxu0 %v716
        %848 = vmatpush.bf16.msra.mxu0 %v715
        %849 = vmatpush.bf16.msra.mxu0 %v714
        %850 = vmatpush.bf16.msra.mxu0 %v713
        %851 = vmatpush.bf16.msra.mxu0 %v712
        %852 = vmatmul.bf16.gmra.mxu0 %v372
        %v853 = vpop.f32.mrf.mxu0
        %v854 = vadd.f32 %v840, %v853
        %v855 = vpop.f32.mrf.mxu0
        %v856 = vadd.f32 %v842, %v855
        %857 = vdwg.mxu0
        %858 = vmatpush.bf16.msra.mxu0 0
        %859 = vmatpush.bf16.msra.mxu0 0
        %860 = vmatpush.bf16.msra.mxu0 0
        %861 = vmatpush.bf16.msra.mxu0 0
        %862 = vmatpush.bf16.msra.mxu0 0
        %863 = vmatpush.bf16.msra.mxu0 0
        %864 = vmatpush.bf16.msra.mxu0 0
        %865 = vmatpush.bf16.msra.mxu0 %v720
        %866 = vmatmul.bf16.gmra.mxu0 %v772
        %v867 = vpop.f32.mrf.mxu0
        %v868 = vadd.f32 %v854, %v867
        %v869 = vpop.f32.mrf.mxu0
        %v870 = vadd.f32 %v856, %v869
        %871 = vdwg.mxu0
        %v872 = vmax.f32 %v868, 0.0
        %v873 = vmax.f32 %v870, 0.0
        %v874 = vpack.c.bf16 %v873, %v872
        %v875 = vld [vmem:[#allocation7] sm:$0xff]
        %v876 = vld [vmem:[#allocation7 + $0x8] sm:$0xff]
        %v877 = vld [vmem:[#allocation7 + $0x10] sm:$0xff]
        %v878 = vld [vmem:[#allocation7 + $0x18] sm:$0xff]
        %v879 = vld [vmem:[#allocation7 + $0x20] sm:$0xff]
        %v880 = vld [vmem:[#allocation7 + $0x28] sm:$0xff]
        %v881 = vld [vmem:[#allocation7 + $0x30] sm:$0xff]
        %v882 = vld [vmem:[#allocation7 + $0x38] sm:$0xff]
        %v883 = vld [vmem:[#allocation7 + $0x40] sm:$0xff]
        %v884 = vld [vmem:[#allocation7 + $0x48] sm:$0xff]
        %v885 = vld [vmem:[#allocation7 + $0x50] sm:$0xff]
        %v886 = vld [vmem:[#allocation7 + $0x58] sm:$0xff]
        %v887 = vld [vmem:[#allocation7 + $0x60] sm:$0xff]
        %v888 = vld [vmem:[#allocation7 + $0x68] sm:$0xff]
        %v889 = vld [vmem:[#allocation7 + $0x70] sm:$0xff]
        %v890 = vld [vmem:[#allocation7 + $0x78] sm:$0xff]
        %v891 = vld [vmem:[%s4] sm:$0x3]
        %v893 = vperm.slane %v891, 0
        %v894 = vperm.slane %v891, 1
        %v913 = vunpack.c.l.b16 %v875
        %v914 = vunpack.c.h.b16 %v875
        %v915 = vunpack.c.l.b16 %v876
        %v916 = vunpack.c.h.b16 %v876
        %v917 = vunpack.c.l.b16 %v877
        %v918 = vunpack.c.h.b16 %v877
        %v919 = vunpack.c.l.b16 %v878
        %v920 = vunpack.c.h.b16 %v878
        %v921 = vunpack.c.l.b16 %v879
        %v922 = vunpack.c.h.b16 %v879
        %v923 = vunpack.c.l.b16 %v880
        %v924 = vunpack.c.h.b16 %v880
        %v925 = vunpack.c.l.b16 %v881
        %v926 = vunpack.c.h.b16 %v881
        %v927 = vunpack.c.l.b16 %v882
        %v928 = vunpack.c.h.b16 %v882
        %v929 = vunpack.c.l.b16 %v883
        %v930 = vunpack.c.h.b16 %v883
        %v931 = vunpack.c.l.b16 %v884
        %v932 = vunpack.c.h.b16 %v884
        %v933 = vunpack.c.l.b16 %v885
        %v934 = vunpack.c.h.b16 %v885
        %v935 = vunpack.c.l.b16 %v886
        %v936 = vunpack.c.h.b16 %v886
        %v937 = vunpack.c.l.b16 %v887
        %v938 = vunpack.c.h.b16 %v887
        %v939 = vunpack.c.l.b16 %v888
        %v940 = vunpack.c.h.b16 %v888
        %v941 = vunpack.c.l.b16 %v889
        %v942 = vunpack.c.h.b16 %v889
        %v943 = vunpack.c.l.b16 %v890
        %v944 = vunpack.c.h.b16 %v890
        %v945 = vpack.c.b16 %v915, %v913
        %v946 = vpack.c.b16 %v916, %v914
        %v947 = vpack.c.b16 %v919, %v917
        %v948 = vpack.c.b16 %v920, %v918
        %v949 = vpack.c.b16 %v923, %v921
        %v950 = vpack.c.b16 %v924, %v922
        %v951 = vpack.c.b16 %v927, %v925
        %v952 = vpack.c.b16 %v928, %v926
        %v953 = vpack.c.b16 %v931, %v929
        %v954 = vpack.c.b16 %v932, %v930
        %v955 = vpack.c.b16 %v935, %v933
        %v956 = vpack.c.b16 %v936, %v934
        %v957 = vpack.c.b16 %v939, %v937
        %v958 = vpack.c.b16 %v940, %v938
        %v959 = vpack.c.b16 %v943, %v941
        %v960 = vpack.c.b16 %v944, %v942
        %977 = vmatpush.bf16.msra.mxu0 %v959
        %978 = vmatpush.bf16.msra.mxu0 %v957
        %979 = vmatpush.bf16.msra.mxu0 %v955
        %980 = vmatpush.bf16.msra.mxu0 %v953
        %981 = vmatpush.bf16.msra.mxu0 %v951
        %982 = vmatpush.bf16.msra.mxu0 %v949
        %983 = vmatpush.bf16.msra.mxu0 %v947
        %984 = vmatpush.bf16.msra.mxu0 %v945
        %985 = vmatmul.bf16.gmra.mxu0 %v874
        %v986 = vpop.f32.mrf.mxu0
        %v987 = vadd.f32 %v893, %v986
        %v988 = vpop.f32.mrf.mxu0
        %v989 = vadd.f32 %v893, %v988
        %990 = vdwg.mxu0
        %991 = vmatpush.bf16.msra.mxu0 %v960
        %992 = vmatpush.bf16.msra.mxu0 %v958
        %993 = vmatpush.bf16.msra.mxu0 %v956
        %994 = vmatpush.bf16.msra.mxu0 %v954
        %995 = vmatpush.bf16.msra.mxu0 %v952
        %996 = vmatpush.bf16.msra.mxu0 %v950
        %997 = vmatpush.bf16.msra.mxu0 %v948
        %998 = vmatpush.bf16.msra.mxu0 %v946
        %999 = vmatmul.bf16.gmra.mxu0 %v874
        %v1000 = vpop.f32.mrf.mxu0
        %v1001 = vadd.f32 %v894, %v1000
        %v1002 = vpop.f32.mrf.mxu0
        %v1003 = vadd.f32 %v894, %v1002
        %1004 = vdwg.mxu0
        %v1005 = vmax.f32 %v987, 0.0
        %v1006 = vmax.f32 %v1001, 0.0
        %v1007 = vmax.f32 %v989, 0.0
        %v1008 = vmax.f32 %v1003, 0.0
        %v1009 = vpack.c.bf16 %v1007, %v1005
        %v1010 = vpack.c.bf16 %v1008, %v1006
        %v1011 = vld [vmem:[#allocation8] sm:$0xf]
        %v1012 = vld [vmem:[#allocation8 + $0x4] sm:$0xf]
        %v1013 = vld [vmem:[#allocation8 + $0x8] sm:$0xf]
        %v1014 = vld [vmem:[#allocation8 + $0xc] sm:$0xf]
        %v1015 = vld [vmem:[#allocation8 + $0x10] sm:$0xf]
        %v1016 = vld [vmem:[#allocation8 + $0x14] sm:$0xf]
        %v1017 = vld [vmem:[#allocation8 + $0x18] sm:$0xf]
        %v1018 = vld [vmem:[#allocation8 + $0x1c] sm:$0xf]
        %v1019 = vld [vmem:[#allocation8 + $0x20] sm:$0xf]
        %v1020 = vld [vmem:[#allocation8 + $0x24] sm:$0xf]
        %v1021 = vld [vmem:[#allocation8 + $0x28] sm:$0xf]
        %v1022 = vld [vmem:[#allocation8 + $0x2c] sm:$0xf]
        %v1023 = vld [vmem:[#allocation8 + $0x30] sm:$0xf]
        %v1024 = vld [vmem:[#allocation8 + $0x34] sm:$0xf]
        %v1025 = vld [vmem:[#allocation8 + $0x38] sm:$0xf]
        %v1026 = vld [vmem:[#allocation8 + $0x3c] sm:$0xf]
        %v1027 = vld [vmem:[#allocation8 + $0x40] sm:$0xf]
        %v1028 = vld [vmem:[#allocation8 + $0x44] sm:$0xf]
        %v1029 = vld [vmem:[#allocation8 + $0x48] sm:$0xf]
        %v1030 = vld [vmem:[#allocation8 + $0x4c] sm:$0xf]
        %v1031 = vld [vmem:[#allocation8 + $0x50] sm:$0xf]
        %v1032 = vld [vmem:[#allocation8 + $0x54] sm:$0xf]
        %v1033 = vld [vmem:[#allocation8 + $0x58] sm:$0xf]
        %v1034 = vld [vmem:[#allocation8 + $0x5c] sm:$0xf]
        %v1035 = vld [vmem:[#allocation8 + $0x60] sm:$0xf]
        %v1036 = vld [vmem:[#allocation8 + $0x64] sm:$0xf]
        %v1037 = vld [vmem:[#allocation8 + $0x68] sm:$0xf]
        %v1038 = vld [vmem:[#allocation8 + $0x6c] sm:$0xf]
        %v1039 = vld [vmem:[#allocation8 + $0x70] sm:$0xf]
        %v1040 = vld [vmem:[#allocation8 + $0x74] sm:$0xf]
        %v1041 = vld [vmem:[#allocation8 + $0x78] sm:$0xf]
        %v1042 = vld [vmem:[#allocation8 + $0x7c] sm:$0xf]
        %v1043 = vld [vmem:[%s6] sm:$0x1]
        %v1045 = vperm.slane %v1043, 0
        %v1079 = vunpack.c.l.b16 %v1011
        %v1080 = vunpack.c.l.b16 %v1012
        %v1081 = vunpack.c.l.b16 %v1013
        %v1082 = vunpack.c.l.b16 %v1014
        %v1083 = vunpack.c.l.b16 %v1015
        %v1084 = vunpack.c.l.b16 %v1016
        %v1085 = vunpack.c.l.b16 %v1017
        %v1086 = vunpack.c.l.b16 %v1018
        %v1087 = vunpack.c.l.b16 %v1019
        %v1088 = vunpack.c.l.b16 %v1020
        %v1089 = vunpack.c.l.b16 %v1021
        %v1090 = vunpack.c.l.b16 %v1022
        %v1091 = vunpack.c.l.b16 %v1023
        %v1092 = vunpack.c.l.b16 %v1024
        %v1093 = vunpack.c.l.b16 %v1025
        %v1094 = vunpack.c.l.b16 %v1026
        %v1095 = vunpack.c.l.b16 %v1027
        %v1096 = vunpack.c.l.b16 %v1028
        %v1097 = vunpack.c.l.b16 %v1029
        %v1098 = vunpack.c.l.b16 %v1030
        %v1099 = vunpack.c.l.b16 %v1031
        %v1100 = vunpack.c.l.b16 %v1032
        %v1101 = vunpack.c.l.b16 %v1033
        %v1102 = vunpack.c.l.b16 %v1034
        %v1103 = vunpack.c.l.b16 %v1035
        %v1104 = vunpack.c.l.b16 %v1036
        %v1105 = vunpack.c.l.b16 %v1037
        %v1106 = vunpack.c.l.b16 %v1038
        %v1107 = vunpack.c.l.b16 %v1039
        %v1108 = vunpack.c.l.b16 %v1040
        %v1109 = vunpack.c.l.b16 %v1041
        %v1110 = vunpack.c.l.b16 %v1042
        %v1111 = vpack.c.b16 %v1080, %v1079
        %v1112 = vpack.c.b16 %v1082, %v1081
        %v1113 = vpack.c.b16 %v1084, %v1083
        %v1114 = vpack.c.b16 %v1086, %v1085
        %v1115 = vpack.c.b16 %v1088, %v1087
        %v1116 = vpack.c.b16 %v1090, %v1089
        %v1117 = vpack.c.b16 %v1092, %v1091
        %v1118 = vpack.c.b16 %v1094, %v1093
        %v1119 = vpack.c.b16 %v1096, %v1095
        %v1120 = vpack.c.b16 %v1098, %v1097
        %v1121 = vpack.c.b16 %v1100, %v1099
        %v1122 = vpack.c.b16 %v1102, %v1101
        %v1123 = vpack.c.b16 %v1104, %v1103
        %v1124 = vpack.c.b16 %v1106, %v1105
        %v1125 = vpack.c.b16 %v1108, %v1107
        %v1126 = vpack.c.b16 %v1110, %v1109
        %1143 = vmatpush.bf16.msra.mxu0 %v1118
        %1144 = vmatpush.bf16.msra.mxu0 %v1117
        %1145 = vmatpush.bf16.msra.mxu0 %v1116
        %1146 = vmatpush.bf16.msra.mxu0 %v1115
        %1147 = vmatpush.bf16.msra.mxu0 %v1114
        %1148 = vmatpush.bf16.msra.mxu0 %v1113
        %1149 = vmatpush.bf16.msra.mxu0 %v1112
        %1150 = vmatpush.bf16.msra.mxu0 %v1111
        %1151 = vmatmul.bf16.gmra.mxu0 %v1009
        %v1152 = vpop.f32.mrf.mxu0
        %v1153 = vadd.f32 %v1045, %v1152
        %v1154 = vpop.f32.mrf.mxu0
        %v1155 = vadd.f32 %v1045, %v1154
        %1156 = vdwg.mxu0
        %1157 = vmatpush.bf16.msra.mxu0 %v1126
        %1158 = vmatpush.bf16.msra.mxu0 %v1125
        %1159 = vmatpush.bf16.msra.mxu0 %v1124
        %1160 = vmatpush.bf16.msra.mxu0 %v1123
        %1161 = vmatpush.bf16.msra.mxu0 %v1122
        %1162 = vmatpush.bf16.msra.mxu0 %v1121
        %1163 = vmatpush.bf16.msra.mxu0 %v1120
        %1164 = vmatpush.bf16.msra.mxu0 %v1119
        %1165 = vmatmul.bf16.gmra.mxu0 %v1010
        %v1166 = vpop.f32.mrf.mxu0
        %v1167 = vadd.f32 %v1153, %v1166
        %v1168 = vpop.f32.mrf.mxu0
        %v1169 = vadd.f32 %v1155, %v1168
        %1170 = vdwg.mxu0
        %v1171 = vpack.c.bf16 %v1167, %v1167
        %v1172 = vpack.c.bf16 %v1169, %v1169
        %1173 = vst [vmem:[%s349] sm:$0xf] %v1171
        %1174 = vst [vmem:[%s349 + $0x4] sm:$0xf] %v1172
        %s1175 = sand.u32 %s186, 1
        %s1176 = scalar_lea.sflag [#allocation4], %s1175
        %s1177 = sand.u32 %s186, 1
        %s1178 = smul.addr %s1177, 8
        %s1179 = scalar_lea.vmem [#allocation10], %s1178
        // Predicated region
        $region65: #{tpu_custom_call.1} parent=47 // pred_check
          %p1180 = pneg %p196
        $region66: #{tpu_custom_call.1} parent=47 // pred_check_branch
          %1182 = sbr.rel (%p1180) target = $region68
        $region67: #{tpu_custom_call.1} parent=47 // pred_region
          %s1183 = smul.u32 2, %s26
          %1185 = vsyncadd %s1176, 0
          %s1186 = smul.addr %s1183, 4
          %s1187 = scalar_lea.hbm %s7, %s1186
          %s1188 = sshll.u32 %s1179, 4
          %s1189 = int_to_ptr.vmem [resolvable:$true] %s1188
          %s1190 = sshll.u32 %s1187, 4
          %s1191 = int_to_ptr.hbm [resolvable:$true] %s1190
          %1196 = dma.vmem_to_hbm [thread:$0]  %s1189, 128, %s1191, %s1176, 64, 64, 4
        $region68: #{tpu_custom_call.1} parent=47 // pred_fallthru
          _
      $region48: #{tpu_custom_call.1} parent=5 // pred_fallthru
        _
      %p1197 = scmp.le.s32.totalorder 2, %s21
      // Predicated region
      $region69: #{tpu_custom_call.1} parent=5 // pred_check
        %p1198 = pneg %p1197
      $region70: #{tpu_custom_call.1} parent=5 // pred_check_branch
        %1200 = sbr.rel (%p1198) target = $region72
      $region71: #{tpu_custom_call.1} parent=5 // pred_region
        %s1201 = ssub.s32 %s21, 2
        // Predicated region
        $region73: #{tpu_custom_call.1} parent=71 // pred_check
          %p1202 = pneg %p202
        $region74: #{tpu_custom_call.1} parent=71 // pred_check_branch
          %1204 = sbr.rel (%p1202) target = $region76
        $region75: #{tpu_custom_call.1} parent=71 // pred_region
          %s1205 = sand.u32 %s187, 1
          %s1206 = scalar_lea.sflag [#allocation4], %s1205
          %s1207 = sand.u32 %s187, 1
          %s1208 = smul.addr %s1207, 8
          %s1209 = scalar_lea.vmem [#allocation10], %s1208
          %1211 = dma.done %s1206, 128
        $region76: #{tpu_custom_call.1} parent=71 // pred_fallthru
          _
      $region72: #{tpu_custom_call.1} parent=5 // pred_fallthru
        _
    $region6: #{tpu_custom_call.1} parent=1 // loop_footer
      %s25 = sadd.s32 1, %s21
    $region7: #{tpu_custom_call.1} parent=1 // loop_footer_branch
      %20 = sbr.rel target = $region3
    $region8: #{tpu_custom_call.1} parent=1 // loop_exit
      _
    %1212 = vsyncpa [#allocation3], 1
    %s1213 = scalar_lea.sflag [#allocation3], 1
    %1214 = vsyncpa %s1213, 1
    %1215 = vsyncpa [#allocation6], 1
    %1216 = vsyncpa [#allocation9], 1
    %1217 = vsyncpa [#allocation4], 1
    %s1218 = scalar_lea.sflag [#allocation4], 1
    %1219 = vsyncpa %s1218, 1

</llo_original>
